<compile_context>
chip_gen: v5e
topology: v5e:2x2
jax: 0.10.0
libtpu: 0.0.40
codegen_flags: <defaults>
</compile_context>

<pallas_src>
import functools

import jax
import jax.numpy as jnp
from jax.experimental import pallas as pl
from jax.experimental.pallas import tpu as pltpu

F_PAD = 128        # every feature dim padded to one lane-dense 128-wide slab
NUM_LAYERS = 3
DROP_LAYER = 1     # dropout applied to the output of layer index 1 (conv2+relu)
DROP_P = 0.4       # F.dropout(p=0.4), training=True default


# ------------------------------ Pallas kernel -------------------------------

def fused_gcn_kernel(a_ref, x_ref, w_ref, b_ref, bits_ref, o_ref,
                     h_ref, xw_ref, acc_ref, *, keep_threshold, drop_scale):
    l = pl.program_id(0)            # layer (sequential)
    i = pl.program_id(1)            # row tile of A / output
    k = pl.program_id(2)            # column tile of A (reduction)
    nk = pl.num_programs(2)
    tm = acc_ref.shape[0]
    tk = a_ref.shape[1]

    # Load the (padded) node features into the resident activation scratch
    # exactly once, at the very first grid step.
    @pl.when((l == 0) & (i == 0) & (k == 0))
    def _():
        h_ref[...] = x_ref[...]

    # Hoisted feature transform: XW = H @ W_l computed once per layer (its
    # contraction dim is tiny), stored in bf16 and reused by every A tile.
    @pl.when((i == 0) & (k == 0))
    def _():
        xw_ref[...] = jnp.dot(
            h_ref[...].astype(jnp.bfloat16), w_ref[0],
            preferred_element_type=jnp.float32).astype(jnp.bfloat16)

    # A @ XW accumulation over the k (A-column) axis.
    @pl.when(k == 0)
    def _():
        acc_ref[...] = jnp.zeros_like(acc_ref)

    k_start = pl.multiple_of(k * tk, tk)
    acc_ref[...] += jnp.dot(a_ref[...], xw_ref[pl.ds(k_start, tk), :],
                            preferred_element_type=jnp.float32)

    # Row-tile epilogue: bias + ReLU, dropout fused after layer DROP_LAYER,
    # write the tile to the resident activation scratch (input of the next
    # layer) and to the lane-dense output block.
    @pl.when(k == nk - 1)
    def _():
        act = jnp.maximum(acc_ref[...] + b_ref[0], 0.0)
        is_drop = l == DROP_LAYER
        keep = bits_ref[...] >= jnp.uint32(keep_threshold)
        act = act * jnp.where(is_drop, drop_scale, 1.0)
        act = jnp.where(jnp.logical_and(is_drop, jnp.logical_not(keep)),
                        0.0, act)
        row_start = pl.multiple_of(i * tm, tm)
        h_ref[pl.ds(row_start, tm), :] = act
        o_ref[...] = act.astype(o_ref.dtype)


# ------------------------------ plain-JAX glue -------------------------------

def _round_up(n, m):
    return ((n + m - 1) // m) * m


def _pick_tile(n, candidates):
    for c in candidates:
        if n % c == 0:
            return c
    return n


def build_normalized_adjacency(edge_index, num_nodes):
    """Dense D^-1/2 (A + I) D^-1/2 (PyG gcn_norm, add_remaining_self_loops)."""
    src, dst = edge_index[0], edge_index[1]
    a = jnp.zeros((num_nodes, num_nodes), jnp.float32)
    a = a.at[dst, src].set(1.0)
    diag = jnp.arange(num_nodes)
    a = a.at[diag, diag].set(1.0)   # set (not add) -> no double-counted self-loops
    deg = a.sum(axis=1)
    d_inv_sqrt = jnp.where(deg > 0, 1.0 / jnp.sqrt(deg), 0.0)
    return d_inv_sqrt[:, None] * a * d_inv_sqrt[None, :]


def glorot(key, fan_in, fan_out):
    limit = jnp.sqrt(6.0 / (fan_in + fan_out))
    return jax.random.uniform(key, (fan_in, fan_out), jnp.float32, -limit, limit)


def init_params(key, in_channels, out_channels):
    # GCN hardcodes hidden widths 32 and 16 (hidden_channels arg is unused).
    k1, k2, k3 = jax.random.split(key, 3)
    return {
        "w1": glorot(k1, in_channels, 32), "b1": jnp.zeros((32,), jnp.float32),
        "w2": glorot(k2, 32, 16),          "b2": jnp.zeros((16,), jnp.float32),
        "w3": glorot(k3, 16, out_channels), "b3": jnp.zeros((out_channels,), jnp.float32),
    }


def gcn_forward(x, edge_index, params, dropout_rng):
    n, in_channels = x.shape
    out_channels = params["w3"].shape[1]
    assert max(in_channels, 32, 16, out_channels) <= F_PAD

    # TODO(synk): for large sparse graphs, skip densification and drive
    # per-row gathers via PrefetchScalarGridSpec with CSR offsets instead.
    a_hat = build_normalized_adjacency(edge_index, n)

    # Pad node axis to a multiple of 128 and feature axes to 128 lanes.
    n_pad = _round_up(n, 128)
    tm = _pick_tile(n_pad, (512, 256, 128))       # A row tile (multiple of MXU edge)
    tk = _pick_tile(n_pad, (1024, 512, 256, 128)) # A col (reduction) tile

    a_pad = jnp.zeros((n_pad, n_pad), jnp.bfloat16).at[:n, :n].set(
        a_hat.astype(jnp.bfloat16))
    x_pad = jnp.zeros((n_pad, F_PAD), jnp.float32).at[:n, :in_channels].set(x)

    w_stack = jnp.zeros((NUM_LAYERS, F_PAD, F_PAD), jnp.bfloat16)
    b_stack = jnp.zeros((NUM_LAYERS, 1, F_PAD), jnp.float32)
    for idx, (w, b) in enumerate([(params["w1"], params["b1"]),
                                  (params["w2"], params["b2"]),
                                  (params["w3"], params["b3"])]):
        fi, fo = w.shape
        w_stack = w_stack.at[idx, :fi, :fo].set(w.astype(jnp.bfloat16))
        b_stack = b_stack.at[idx, 0, :fo].set(b)

    # Dropout randomness: raw uint32 bits drawn outside the kernel (the TPU
    # hardware PRNG has no interpret lowering), thresholded in-kernel.
    bits = jax.random.bits(dropout_rng, (n_pad, F_PAD), jnp.uint32)
    keep_threshold = min(int(round(DROP_P * 2.0 ** 32)), 2 ** 32 - 1)
    drop_scale = 1.0 / (1.0 - DROP_P)

    grid = (NUM_LAYERS, n_pad // tm, n_pad // tk)
    kernel = functools.partial(fused_gcn_kernel,
                               keep_threshold=keep_threshold,
                               drop_scale=drop_scale)

    # Explicit VMEM budget (double-buffered inputs + resident scratches).
    vmem_bytes = (2 * tm * tk * 2            # A tiles (bf16)
                  + 2 * n_pad * F_PAD * 4    # X block
                  + 2 * F_PAD * F_PAD * 2    # W block
                  + 2 * F_PAD * 4            # b block
                  + 2 * tm * F_PAD * 4       # dropout bits block
                  + 2 * tm * F_PAD * 4       # out block
                  + n_pad * F_PAD * 4        # H scratch
                  + n_pad * F_PAD * 2        # XW scratch
                  + tm * F_PAD * 4)          # accumulator
    vmem_limit = int(min(max(2 * vmem_bytes, 32 * 1024 * 1024),
                         60 * 1024 * 1024))

    out_pad = pl.pallas_call(
        kernel,
        out_shape=jax.ShapeDtypeStruct((n_pad, F_PAD), jnp.float32),
        grid=grid,
        in_specs=[
            pl.BlockSpec((tm, tk), lambda l, i, k: (i, k)),              # A_hat tiles
            pl.BlockSpec((n_pad, F_PAD), lambda l, i, k: (0, 0)),        # X (resident)
            pl.BlockSpec((1, F_PAD, F_PAD), lambda l, i, k: (l, 0, 0)),  # W_l
            pl.BlockSpec((1, 1, F_PAD), lambda l, i, k: (l, 0, 0)),      # b_l
            pl.BlockSpec((tm, F_PAD), lambda l, i, k: (i, 0)),           # dropout bits
        ],
        out_specs=pl.BlockSpec((tm, F_PAD), lambda l, i, k: (i, 0)),
        scratch_shapes=[
            pltpu.VMEM((n_pad, F_PAD), jnp.float32),   # H  (layer activations)
            pltpu.VMEM((n_pad, F_PAD), jnp.bfloat16),  # XW (current layer)
            pltpu.VMEM((tm, F_PAD), jnp.float32),      # A@XW accumulator
        ],
        compiler_params=pltpu.CompilerParams(
            dimension_semantics=("arbitrary", "arbitrary", "arbitrary"),
            vmem_limit_bytes=vmem_limit,
        ),
    )(a_pad, x_pad, w_stack, b_stack, bits)

    return out_pad[:n, :out_channels]


# ---------------------------------- main -------------------------------------

if __name__ == "__main__":
    key = jax.random.PRNGKey(0)
    k_x, k_e, k_p, k_d = jax.random.split(key, 4)

    num_nodes = 16
    in_channels = 4
    out_channels = 8
    num_edges = 40

    x = jax.random.normal(k_x, (num_nodes, in_channels), jnp.float32)
    e = jax.random.randint(k_e, (2, num_edges), 0, num_nodes)
    edge_index = jnp.concatenate([e, e[::-1]], axis=1)   # symmetric edges

    params = init_params(k_p, in_channels, out_channels)

    out = gcn_forward(x, edge_index, params, dropout_rng=k_d)
    out = jax.block_until_ready(out)
    assert out.shape == (num_nodes, out_channels)
    assert bool(jnp.all(out >= 0.0))   # final ReLU
    print("KERNEL_OK")
</pallas_src>

<mosaic_0001>
module attributes {stable_mosaic.version = 11 : i64} {
  func.func @fused_gcn_kernel(%arg0: i32, %arg1: i32, %arg2: i32, %arg3: memref<128x128xbf16, #tpu.memory_space<vmem>>, %arg4: memref<128x128xf32, #tpu.memory_space<vmem>>, %arg5: memref<1x128x128xbf16, #tpu.memory_space<vmem>>, %arg6: memref<1x1x128xf32, #tpu.memory_space<vmem>>, %arg7: memref<128x128xi32, #tpu.memory_space<vmem>>, %arg8: memref<128x128xf32, #tpu.memory_space<vmem>>, %arg9: memref<128x128xf32, #tpu.memory_space<vmem>>, %arg10: memref<128x128xbf16, #tpu.memory_space<vmem>>, %arg11: memref<128x128xf32, #tpu.memory_space<vmem>>) attributes {dimension_semantics = [#tpu.dimension_semantics<arbitrary>, #tpu.dimension_semantics<arbitrary>, #tpu.dimension_semantics<arbitrary>], iteration_bounds = array<i64: 3, 1, 1>, scalar_prefetch = 0 : i64, scratch_operands = 3 : i64, tpu.core_type = #tpu.core_type<tc>, window_params = [{transform_indices = @transform_0, window_bounds = array<i64: 128, 128>}, {pipeline_mode = #tpu.pipeline_mode<synchronous>, transform_indices = @transform_1, window_bounds = array<i64: 128, 128>}, {transform_indices = @transform_2, window_bounds = array<i64: 1, 128, 128>}, {transform_indices = @transform_3, window_bounds = array<i64: 1, 1, 128>}, {transform_indices = @transform_4, window_bounds = array<i64: 128, 128>}, {transform_indices = @transform_5, window_bounds = array<i64: 128, 128>}]} {
    %c0_i32 = arith.constant 0 : i32
    %0 = arith.cmpi eq, %arg0, %c0_i32 : i32
    %c0_i32_0 = arith.constant 0 : i32
    %1 = arith.cmpi eq, %arg1, %c0_i32_0 : i32
    %2 = arith.andi %0, %1 : i1
    %c0_i32_1 = arith.constant 0 : i32
    %3 = arith.cmpi eq, %arg2, %c0_i32_1 : i32
    %4 = arith.andi %2, %3 : i1
    %5 = arith.extui %4 : i1 to i32
    %c0_i32_2 = arith.constant 0 : i32
    %6 = arith.cmpi ne, %5, %c0_i32_2 : i32
    scf.if %6 {
      %c0_16 = arith.constant 0 : index
      %c0_17 = arith.constant 0 : index
      %27 = vector.load %arg4[%c0_16, %c0_17] : memref<128x128xf32, #tpu.memory_space<vmem>>, vector<128x128xf32>
      %c0_18 = arith.constant 0 : index
      %c0_19 = arith.constant 0 : index
      %28 = vector.load %arg9[%c0_18, %c0_19] : memref<128x128xf32, #tpu.memory_space<vmem>>, vector<128x128xf32>
      tpu.vector_store %arg9[%c0_18, %c0_19], %27 {strides = array<i32>} : memref<128x128xf32, #tpu.memory_space<vmem>>, vector<128x128xf32>,
    } else {
    }
    %c0_i32_3 = arith.constant 0 : i32
    %7 = arith.cmpi eq, %arg1, %c0_i32_3 : i32
    %c0_i32_4 = arith.constant 0 : i32
    %8 = arith.cmpi eq, %arg2, %c0_i32_4 : i32
    %9 = arith.andi %7, %8 : i1
    %10 = arith.extui %9 : i1 to i32
    %c0_i32_5 = arith.constant 0 : i32
    %11 = arith.cmpi ne, %10, %c0_i32_5 : i32
    scf.if %11 {
      %c0_16 = arith.constant 0 : index
      %c0_17 = arith.constant 0 : index
      %27 = vector.load %arg9[%c0_16, %c0_17] : memref<128x128xf32, #tpu.memory_space<vmem>>, vector<128x128xf32>
      %28 = arith.truncf %27 : vector<128x128xf32> to vector<128x128xbf16>
      %c0_18 = arith.constant 0 : index
      %c0_19 = arith.constant 0 : index
      %c0_20 = arith.constant 0 : index
      %29 = vector.load %arg5[%c0_18, %c0_19, %c0_20] : memref<1x128x128xbf16, #tpu.memory_space<vmem>>, vector<1x128x128xbf16>
      %30 = vector.shape_cast %29 : vector<1x128x128xbf16> to vector<128x128xbf16>
      %cst_21 = arith.constant dense<0.000000e+00> : vector<128x128xf32>
      %31 = tpu.matmul %28, %30, %cst_21 {dimension_numbers = #tpu.dot_dimension_numbers<[1], [0], [0], [1], [0, 0, 1, 1], [], []>} : vector<128x128xbf16>, vector<128x128xbf16>, vector<128x128xf32> -> vector<128x128xf32>
      %32 = arith.truncf %31 : vector<128x128xf32> to vector<128x128xbf16>
      %c0_22 = arith.constant 0 : index
      %c0_23 = arith.constant 0 : index
      %33 = vector.load %arg10[%c0_22, %c0_23] : memref<128x128xbf16, #tpu.memory_space<vmem>>, vector<128x128xbf16>
      tpu.vector_store %arg10[%c0_22, %c0_23], %32 {strides = array<i32>} : memref<128x128xbf16, #tpu.memory_space<vmem>>, vector<128x128xbf16>,
    } else {
    }
    %c0_i32_6 = arith.constant 0 : i32
    %12 = arith.cmpi eq, %arg2, %c0_i32_6 : i32
    %13 = arith.extui %12 : i1 to i32
    %c0_i32_7 = arith.constant 0 : i32
    %14 = arith.cmpi ne, %13, %c0_i32_7 : i32
    scf.if %14 {
      %cst_16 = arith.constant 0.000000e+00 : f32
      %27 = vector.broadcast %cst_16 : f32 to vector<128x128xf32>
      %c0_17 = arith.constant 0 : index
      %c0_18 = arith.constant 0 : index
      %28 = vector.load %arg11[%c0_17, %c0_18] : memref<128x128xf32, #tpu.memory_space<vmem>>, vector<128x128xf32>
      tpu.vector_store %arg11[%c0_17, %c0_18], %27 {strides = array<i32>} : memref<128x128xf32, #tpu.memory_space<vmem>>, vector<128x128xf32>,
    } else {
    }
    %c128_i32 = arith.constant 128 : i32
    %15 = arith.muli %arg2, %c128_i32 : i32
    %16 = tpu.assume_multiple %15, 128 : i32
    %c0 = arith.constant 0 : index
    %c0_8 = arith.constant 0 : index
    %17 = vector.load %arg11[%c0, %c0_8] : memref<128x128xf32, #tpu.memory_space<vmem>>, vector<128x128xf32>
    %c0_9 = arith.constant 0 : index
    %c0_10 = arith.constant 0 : index
    %18 = vector.load %arg3[%c0_9, %c0_10] : memref<128x128xbf16, #tpu.memory_space<vmem>>, vector<128x128xbf16>
    %19 = arith.index_cast %16 : i32 to index
    %c0_11 = arith.constant 0 : index
    %20 = vector.load %arg10[%19, %c0_11] : memref<128x128xbf16, #tpu.memory_space<vmem>>, vector<128x128xbf16>
    %cst = arith.constant dense<0.000000e+00> : vector<128x128xf32>
    %21 = tpu.matmul %18, %20, %cst {dimension_numbers = #tpu.dot_dimension_numbers<[1], [0], [0], [1], [0, 0, 1, 1], [], []>} : vector<128x128xbf16>, vector<128x128xbf16>, vector<128x128xf32> -> vector<128x128xf32>
    %22 = arith.addf %17, %21 : vector<128x128xf32>
    %c0_12 = arith.constant 0 : index
    %c0_13 = arith.constant 0 : index
    %23 = vector.load %arg11[%c0_12, %c0_13] : memref<128x128xf32, #tpu.memory_space<vmem>>, vector<128x128xf32>
    tpu.vector_store %arg11[%c0_12, %c0_13], %22 {strides = array<i32>} : memref<128x128xf32, #tpu.memory_space<vmem>>, vector<128x128xf32>,
    %c0_i32_14 = arith.constant 0 : i32
    %24 = arith.cmpi eq, %arg2, %c0_i32_14 : i32
    %25 = arith.extui %24 : i1 to i32
    %c0_i32_15 = arith.constant 0 : i32
    %26 = arith.cmpi ne, %25, %c0_i32_15 : i32
    scf.if %26 {
      %c0_16 = arith.constant 0 : index
      %c0_17 = arith.constant 0 : index
      %27 = vector.load %arg11[%c0_16, %c0_17] : memref<128x128xf32, #tpu.memory_space<vmem>>, vector<128x128xf32>
      %c0_18 = arith.constant 0 : index
      %c0_19 = arith.constant 0 : index
      %c0_20 = arith.constant 0 : index
      %28 = vector.load %arg6[%c0_18, %c0_19, %c0_20] : memref<1x1x128xf32, #tpu.memory_space<vmem>>, vector<1x1x128xf32>
      %29 = vector.shape_cast %28 : vector<1x1x128xf32> to vector<1x128xf32>
      %30 = vector.broadcast %29 : vector<1x128xf32> to vector<128x128xf32>
      %31 = arith.addf %27, %30 : vector<128x128xf32>
      %cst_21 = arith.constant 0.000000e+00 : f32
      %32 = vector.broadcast %cst_21 : f32 to vector<128x128xf32>
      %33 = arith.maximumf %31, %32 : vector<128x128xf32>
      %c1_i32 = arith.constant 1 : i32
      %34 = arith.cmpi eq, %arg0, %c1_i32 : i32
      %c0_22 = arith.constant 0 : index
      %c0_23 = arith.constant 0 : index
      %35 = vector.load %arg7[%c0_22, %c0_23] : memref<128x128xi32, #tpu.memory_space<vmem>>, vector<128x128xi32>
      %c1717986918_i32 = arith.constant 1717986918 : i32
      %36 = vector.broadcast %c1717986918_i32 : i32 to vector<128x128xi32>
      %37 = arith.cmpi uge, %35, %36 : vector<128x128xi32>
      %cst_24 = arith.constant 1.66666663 : f32
      %cst_25 = arith.constant 1.000000e+00 : f32
      %38 = arith.select %34, %cst_24, %cst_25 : f32
      %39 = vector.broadcast %38 : f32 to vector<128x128xf32>
      %40 = arith.mulf %33, %39 : vector<128x128xf32>
      %cst_26 = arith.constant dense<true> : vector<128x128xi1>
      %41 = arith.xori %37, %cst_26 : vector<128x128xi1>
      %42 = vector.broadcast %34 : i1 to vector<128x128xi1>
      %43 = arith.andi %42, %41 : vector<128x128xi1>
      %cst_27 = arith.constant 0.000000e+00 : f32
      %44 = vector.broadcast %cst_27 : f32 to vector<128x128xf32>
      %45 = arith.select %43, %44, %40 : vector<128x128xi1>, vector<128x128xf32>
      %c128_i32_28 = arith.constant 128 : i32
      %46 = arith.muli %arg1, %c128_i32_28 : i32
      %47 = tpu.assume_multiple %46, 128 : i32
      %48 = arith.index_cast %47 : i32 to index
      %c0_29 = arith.constant 0 : index
      %49 = vector.load %arg9[%48, %c0_29] : memref<128x128xf32, #tpu.memory_space<vmem>>, vector<128x128xf32>
      tpu.vector_store %arg9[%48, %c0_29], %45 {strides = array<i32>} : memref<128x128xf32, #tpu.memory_space<vmem>>, vector<128x128xf32>,
      %c0_30 = arith.constant 0 : index
      %c0_31 = arith.constant 0 : index
      %50 = vector.load %arg8[%c0_30, %c0_31] : memref<128x128xf32, #tpu.memory_space<vmem>>, vector<128x128xf32>
      tpu.vector_store %arg8[%c0_30, %c0_31], %45 {strides = array<i32>} : memref<128x128xf32, #tpu.memory_space<vmem>>, vector<128x128xf32>,
    } else {
    }
    return
  }
  func.func @transform_0(%arg0: i32, %arg1: i32, %arg2: i32) -> (i32, i32) {
    %c0_i32 = arith.constant 0 : i32
    return %arg1, %arg2 : i32, i32
  }
  func.func @transform_1(%arg0: i32, %arg1: i32, %arg2: i32) -> (i32, i32) {
    %c0_i32 = arith.constant 0 : i32
    %c0_i32_0 = arith.constant 0 : i32
    %c0_i32_1 = arith.constant 0 : i32
    return %c0_i32, %c0_i32_0 : i32, i32
  }
  func.func @transform_2(%arg0: i32, %arg1: i32, %arg2: i32) -> (i32, i32, i32) {
    %c0_i32 = arith.constant 0 : i32
    %c0_i32_0 = arith.constant 0 : i32
    %c0_i32_1 = arith.constant 0 : i32
    return %arg0, %c0_i32, %c0_i32_0 : i32, i32, i32
  }
  func.func @transform_3(%arg0: i32, %arg1: i32, %arg2: i32) -> (i32, i32, i32) {
    %c0_i32 = arith.constant 0 : i32
    %c0_i32_0 = arith.constant 0 : i32
    %c0_i32_1 = arith.constant 0 : i32
    return %arg0, %c0_i32, %c0_i32_0 : i32, i32, i32
  }
  func.func @transform_4(%arg0: i32, %arg1: i32, %arg2: i32) -> (i32, i32) {
    %c0_i32 = arith.constant 0 : i32
    %c0_i32_0 = arith.constant 0 : i32
    return %arg1, %c0_i32 : i32, i32
  }
  func.func @transform_5(%arg0: i32, %arg1: i32, %arg2: i32) -> (i32, i32) {
    %c0_i32 = arith.constant 0 : i32
    %c0_i32_0 = arith.constant 0 : i32
    return %arg1, %c0_i32 : i32, i32
  }
}

</mosaic_0001>

<llo_original>
// kernel: tpu_custom_call.1
$region0: #{tpu_custom_call.1}
  #allocation0 [shape = 'u32[]', space=smem, size = 0x4, offset = 0x4, fixed_abs, tag = 'smem constant byte address 0x4 - core index']
  #allocation1 [shape = 'u32[72,128]{1,0:T(1,128)}', space=vmem, size = 0x9000, scoped, tag = 'internal scratch']
  #allocation2 [shape = 'f32[128,128]{1,0:T(8,128)}', space=vmem, size = 0x10000, scoped, tag = 'scratch operand']
  #allocation3 [shape = 'bf16[128,128]{1,0:T(8,128)(2,1)}', space=vmem, size = 0x8000, scoped, tag = 'scratch operand']
  #allocation4 [shape = 'f32[128,128]{1,0:T(8,128)}', space=vmem, size = 0x10000, scoped, tag = 'scratch operand']
  %s0 = inlined_call_operand.hbm [shape: bf16[128,128], index: 0, kind: input, shape index: {}]
  %s1 = inlined_call_operand.hbm [shape: f32[128,128], index: 1, kind: input, shape index: {}]
  %s2 = inlined_call_operand.hbm [shape: bf16[3,128,128], index: 2, kind: input, shape index: {}]
  %s3 = inlined_call_operand.hbm [shape: f32[3,1,128], index: 3, kind: input, shape index: {}]
  %s4 = inlined_call_operand.hbm [shape: u32[128,128], index: 4, kind: input, shape index: {}]
  %s5 = inlined_call_operand.hbm [shape: f32[128,128], index: 5, kind: output, shape index: {}]
  %s6 = sld [smem:[#allocation0]]
  $region89: #{tpu_custom_call.1} parent=0
    _
  %s8 = ssub.s32 1, %s6
  %s9 = scalar_select 0, %s8, %s6
  $region1: #{tpu_custom_call.1} parent=0
    #allocation5 [shape = 'u8[32768]{0}', space=vmem, size = 0x8000, scoped, tag = 'input window, operand 0, single buffered']
    #allocation6 [shape = 's32[2]{0}', space=sflag, size = 0x8, scoped, tag = 'scoped memory for tpu_custom_call.1']
    #allocation7 [shape = 's32[2]{0}', space=sflag, size = 0x8, scoped, tag = 'scoped memory for tpu_custom_call.1']
    #allocation8 [shape = 'u8[65536]{0}', space=vmem, size = 0x10000, scoped, tag = 'input window, operand 1, single buffered']
    #allocation9 [shape = 's32[1]{0}', space=sflag, size = 0x4, scoped, tag = 'scoped memory for tpu_custom_call.1']
    #allocation10 [shape = 'u8[65536]{0}', space=vmem, size = 0x10000, scoped, tag = 'input window, operand 2']
    #allocation11 [shape = 'u8[1024]{0}', space=vmem, size = 0x400, scoped, tag = 'input window, operand 3']
    #allocation12 [shape = 'u8[65536]{0}', space=vmem, size = 0x10000, scoped, tag = 'input window, operand 4, single buffered']
    #allocation13 [shape = 'u8[65536]{0}', space=vmem, size = 0x10000, scoped, tag = 'output window, operand 0, single buffered']
    %10 = vsyncpa [#allocation6], 0
    %11 = vsyncpa [#allocation9], 0
    %12 = vsyncpa [#allocation7], 0
    loop: start=0, step=1, limit=5
    $region2: #{tpu_custom_call.1} parent=1 // loop_pre_header
      _
    $region3: #{tpu_custom_call.1} parent=1 // loop_header
      %s14 = sphi 0, %s18
      %p15 = scmp.ge.s32.totalorder %s14, 5
      %s21 = sphi 0, %s40
      %s22 = sphi 0, %s36
      %s23 = sphi 0, %s32
      %s24 = sphi 0, %s21
      %s25 = sphi 0, %s22
      %s26 = sphi 0, %s23
      %s27 = sphi 0, %s24
      %s28 = sphi 0, %s25
      %s29 = sphi 0, %s26
      %s45 = sphi 0, %s47
      %s48 = sphi 0, %s45
      %s49 = sphi 0, %s48
      %s65 = sphi 0, %s49
      %s69 = sphi 0, %s69
      %s71 = sphi 0, %s69
      %s72 = sphi 0, %s71
      %s86 = sphi 0, %s72
      %s92 = sphi 0, %s94
      %s95 = sphi 0, %s92
      %s96 = sphi 0, %s95
      %s112 = sphi 0, %s96
      %s118 = sphi 0, %s120
      %s121 = sphi 0, %s118
      %s122 = sphi 0, %s121
      %s138 = sphi 0, %s122
      %s144 = sphi 0, %s146
      %s147 = sphi 0, %s144
      %s148 = sphi 0, %s147
      %s164 = sphi 0, %s148
      %s170 = sphi 0, %s172
      %s173 = sphi 0, %s170
      %s174 = sphi 0, %s173
      %s190 = sphi 0, %s174
    $region4: #{tpu_custom_call.1} parent=1 // loop_header_branch
      %17 = sbr.rel (%p15) target = $region8
    $region5: #{tpu_custom_call.1} parent=1 // loop_body
      %s19 = ssub.s32 %s14, 1
      %s20 = ssub.s32 %s14, 2
      %s30 = sadd.s32 1, %s23
      %p31 = scmp.ge.s32.totalorder %s30, 1
      %s32 = scalar_select %p31, 0, %s30
      %s33 = sadd.s32 1, %s22
      %s34 = scalar_select %p31, %s33, %s22
      %p35 = scmp.ge.s32.totalorder %s34, 1
      %s36 = scalar_select %p35, 0, %s34
      %s37 = sadd.s32 1, %s21
      %s38 = scalar_select %p35, %s37, %s21
      %p39 = scmp.ge.s32.totalorder %s38, 3
      %s40 = scalar_select %p39, 0, %s38
      %s41 = ssub.s32 %s22, %s36
      %s42 = ssub.s32 %s23, %s32
      %s43 = sor.u32 %s41, %s42
      %p44 = scmp.eq.s32.totalorder %s43, 0
      %s46 = sadd.s32 %s45, 1
      %s47 = scalar_select %p44, %s45, %s46
      %p50 = pneg %p44
      %p51 = scmp.eq.s32.totalorder %s14, 2
      %p52 = por %p50, %p51
      %p53 = scmp.ne.s32.totalorder %s45, %s48
      %p54 = scmp.eq.s32.totalorder %s14, 0
      %p55 = por %p53, %p54
      %p56 = scmp.ne.s32.totalorder %s45, %s48
      %p57 = scmp.eq.s32.totalorder %s19, 2
      %p58 = por %p56, %p57
      %p59 = scmp.ne.s32.totalorder %s48, %s49
      %p60 = scmp.eq.s32.totalorder %s19, 0
      %p61 = por %p59, %p60
      %p62 = scmp.ne.s32.totalorder %s48, %s49
      %p63 = scmp.eq.s32.totalorder %s20, 2
      %p64 = por %p62, %p63
      %p66 = scmp.ne.s32.totalorder %s49, %s65
      %p67 = scmp.eq.s32.totalorder %s20, 0
      %p68 = por %p66, %p67
      %s70 = sadd.s32 %s69, 1
      %p73 = scmp.eq.s32.totalorder %s14, 2
      %p74 = scmp.ne.s32.totalorder %s69, %s71
      %p75 = scmp.eq.s32.totalorder %s14, 0
      %p76 = por %p74, %p75
      %p77 = scmp.ne.s32.totalorder %s69, %s71
      %p78 = scmp.eq.s32.totalorder %s19, 2
      %p79 = por %p77, %p78
      %p80 = scmp.ne.s32.totalorder %s71, %s72
      %p81 = scmp.eq.s32.totalorder %s19, 0
      %p82 = por %p80, %p81
      %p83 = scmp.ne.s32.totalorder %s71, %s72
      %p84 = scmp.eq.s32.totalorder %s20, 2
      %p85 = por %p83, %p84
      %p87 = scmp.ne.s32.totalorder %s72, %s86
      %p88 = scmp.eq.s32.totalorder %s20, 0
      %p89 = por %p87, %p88
      %s90 = ssub.s32 %s21, %s40
      %p91 = scmp.eq.s32.totalorder %s90, 0
      %s93 = sadd.s32 %s92, 1
      %s94 = scalar_select %p91, %s92, %s93
      %p97 = pneg %p91
      %p98 = scmp.eq.s32.totalorder %s14, 2
      %p99 = por %p97, %p98
      %p100 = scmp.ne.s32.totalorder %s92, %s95
      %p101 = scmp.eq.s32.totalorder %s14, 0
      %p102 = por %p100, %p101
      %p103 = scmp.ne.s32.totalorder %s92, %s95
      %p104 = scmp.eq.s32.totalorder %s19, 2
      %p105 = por %p103, %p104
      %p106 = scmp.ne.s32.totalorder %s95, %s96
      %p107 = scmp.eq.s32.totalorder %s19, 0
      %p108 = por %p106, %p107
      %p109 = scmp.ne.s32.totalorder %s95, %s96
      %p110 = scmp.eq.s32.totalorder %s20, 2
      %p111 = por %p109, %p110
      %p113 = scmp.ne.s32.totalorder %s96, %s112
      %p114 = scmp.eq.s32.totalorder %s20, 0
      %p115 = por %p113, %p114
      %s116 = ssub.s32 %s21, %s40
      %p117 = scmp.eq.s32.totalorder %s116, 0
      %s119 = sadd.s32 %s118, 1
      %s120 = scalar_select %p117, %s118, %s119
      %p123 = pneg %p117
      %p124 = scmp.eq.s32.totalorder %s14, 2
      %p125 = por %p123, %p124
      %p126 = scmp.ne.s32.totalorder %s118, %s121
      %p127 = scmp.eq.s32.totalorder %s14, 0
      %p128 = por %p126, %p127
      %p129 = scmp.ne.s32.totalorder %s118, %s121
      %p130 = scmp.eq.s32.totalorder %s19, 2
      %p131 = por %p129, %p130
      %p132 = scmp.ne.s32.totalorder %s121, %s122
      %p133 = scmp.eq.s32.totalorder %s19, 0
      %p134 = por %p132, %p133
      %p135 = scmp.ne.s32.totalorder %s121, %s122
      %p136 = scmp.eq.s32.totalorder %s20, 2
      %p137 = por %p135, %p136
      %p139 = scmp.ne.s32.totalorder %s122, %s138
      %p140 = scmp.eq.s32.totalorder %s20, 0
      %p141 = por %p139, %p140
      %s142 = ssub.s32 %s22, %s36
      %p143 = scmp.eq.s32.totalorder %s142, 0
      %s145 = sadd.s32 %s144, 1
      %s146 = scalar_select %p143, %s144, %s145
      %p149 = pneg %p143
      %p150 = scmp.eq.s32.totalorder %s14, 2
      %p151 = por %p149, %p150
      %p152 = scmp.ne.s32.totalorder %s144, %s147
      %p153 = scmp.eq.s32.totalorder %s14, 0
      %p154 = por %p152, %p153
      %p155 = scmp.ne.s32.totalorder %s144, %s147
      %p156 = scmp.eq.s32.totalorder %s19, 2
      %p157 = por %p155, %p156
      %p158 = scmp.ne.s32.totalorder %s147, %s148
      %p159 = scmp.eq.s32.totalorder %s19, 0
      %p160 = por %p158, %p159
      %p161 = scmp.ne.s32.totalorder %s147, %s148
      %p162 = scmp.eq.s32.totalorder %s20, 2
      %p163 = por %p161, %p162
      %p165 = scmp.ne.s32.totalorder %s148, %s164
      %p166 = scmp.eq.s32.totalorder %s20, 0
      %p167 = por %p165, %p166
      %s168 = ssub.s32 %s22, %s36
      %p169 = scmp.eq.s32.totalorder %s168, 0
      %s171 = sadd.s32 %s170, 1
      %s172 = scalar_select %p169, %s170, %s171
      %p175 = pneg %p169
      %p176 = scmp.eq.s32.totalorder %s14, 2
      %p177 = por %p175, %p176
      %p178 = scmp.ne.s32.totalorder %s170, %s173
      %p179 = scmp.eq.s32.totalorder %s14, 0
      %p180 = por %p178, %p179
      %p181 = scmp.ne.s32.totalorder %s170, %s173
      %p182 = scmp.eq.s32.totalorder %s19, 2
      %p183 = por %p181, %p182
      %p184 = scmp.ne.s32.totalorder %s173, %s174
      %p185 = scmp.eq.s32.totalorder %s19, 0
      %p186 = por %p184, %p185
      %p187 = scmp.ne.s32.totalorder %s173, %s174
      %p188 = scmp.eq.s32.totalorder %s20, 2
      %p189 = por %p187, %p188
      %p191 = scmp.ne.s32.totalorder %s174, %s190
      %p192 = scmp.eq.s32.totalorder %s20, 0
      %p193 = por %p191, %p192
      %p194 = scmp.le.s32.totalorder 1, %s14
      %p195 = scmp.lt.s32.totalorder %s14, 4
      %p196 = pnand %p194, %p195
      %p197 = pneg %p196
      // Predicated region
      $region9: #{tpu_custom_call.1} parent=5 // pred_check
        _
      $region10: #{tpu_custom_call.1} parent=5 // pred_check_branch
        %199 = sbr.rel (%p196) target = $region12
      $region11: #{tpu_custom_call.1} parent=5 // pred_region
        %s200 = ssub.s32 %s14, 1
        // Predicated region
        $region13: #{tpu_custom_call.1} parent=11 // pred_check
          %p201 = pneg %p61
        $region14: #{tpu_custom_call.1} parent=11 // pred_check_branch
          %203 = sbr.rel (%p201) target = $region16
        $region15: #{tpu_custom_call.1} parent=11 // pred_region
          %s204 = smul.u32 16, %s25
          %206 = vsyncadd [#allocation6], 0
          %s207 = sadd.s32 %s26, %s204
          %s208 = smul.addr %s207, 4
          %s209 = scalar_lea.hbm %s0, %s208
          %s210 = sshll.u32 %s209, 4
          %s211 = int_to_ptr.hbm [resolvable:$true] %s210
          %s212 = sshll.u32 [#allocation5], 4
          %s213 = int_to_ptr.vmem [resolvable:$true] %s212
          %218 = dma.hbm_to_vmem [thread:$0]  %s211, 1024, %s213, [#allocation6], 64, 64, 4
        $region16: #{tpu_custom_call.1} parent=11 // pred_fallthru
          _
        // Predicated region
        $region17: #{tpu_custom_call.1} parent=11 // pred_check
          %p219 = pneg %p82
        $region18: #{tpu_custom_call.1} parent=11 // pred_check_branch
          %221 = sbr.rel (%p219) target = $region20
        $region19: #{tpu_custom_call.1} parent=11 // pred_region
          %223 = vsyncadd [#allocation9], 0
          %s224 = sshll.u32 %s1, 4
          %s225 = int_to_ptr.hbm [resolvable:$true] %s224
          %s226 = sshll.u32 [#allocation8], 4
          %s227 = int_to_ptr.vmem [resolvable:$true] %s226
          %232 = dma.hbm_to_vmem [thread:$0]  %s225, 2048, %s227, [#allocation9], 128, 128, 8
        $region20: #{tpu_custom_call.1} parent=11 // pred_fallthru
          _
        // Predicated region
        $region21: #{tpu_custom_call.1} parent=11 // pred_check
          %p233 = pneg %p160
        $region22: #{tpu_custom_call.1} parent=11 // pred_check_branch
          %235 = sbr.rel (%p233) target = $region24
        $region23: #{tpu_custom_call.1} parent=11 // pred_region
          %s236 = smul.u32 16, %s25
          %238 = vsyncadd [#allocation9], 0
          %s239 = smul.addr %s236, 8
          %s240 = scalar_lea.hbm %s4, %s239
          %s241 = sshll.u32 %s240, 4
          %s242 = int_to_ptr.hbm [resolvable:$true] %s241
          %s243 = sshll.u32 [#allocation12], 4
          %s244 = int_to_ptr.vmem [resolvable:$true] %s243
          %249 = dma.hbm_to_vmem [thread:$0]  %s242, 2048, %s244, [#allocation9], 128, 128, 8
        $region24: #{tpu_custom_call.1} parent=11 // pred_fallthru
          _
      $region12: #{tpu_custom_call.1} parent=5 // pred_fallthru
        _
      %p250 = scmp.lt.s32.totalorder %s14, 3
      // Predicated region
      $region25: #{tpu_custom_call.1} parent=5 // pred_check
        %p251 = pneg %p250
      $region26: #{tpu_custom_call.1} parent=5 // pred_check_branch
        %253 = sbr.rel (%p251) target = $region28
      $region27: #{tpu_custom_call.1} parent=5 // pred_region
        // Predicated region
        $region29: #{tpu_custom_call.1} parent=27 // pred_check
          %p254 = pneg %p102
        $region30: #{tpu_custom_call.1} parent=27 // pred_check_branch
          %256 = sbr.rel (%p254) target = $region32
        $region31: #{tpu_custom_call.1} parent=27 // pred_region
          %s257 = sand.u32 %s14, 1
          %s258 = scalar_lea.sflag [#allocation6], %s257
          %s259 = sand.u32 %s92, 1
          %s260 = smul.addr %s259, 64
          %s261 = scalar_lea.vmem [#allocation10], %s260
          %263 = vsyncadd %s258, 0
          %s264 = smul.addr %s21, 16
          %s265 = smul.addr %s264, 4
          %s266 = scalar_lea.hbm %s2, %s265
          %s267 = sshll.u32 %s266, 4
          %s268 = int_to_ptr.hbm [resolvable:$true] %s267
          %s269 = sshll.u32 %s261, 4
          %s270 = int_to_ptr.vmem [resolvable:$true] %s269
          %275 = dma.hbm_to_vmem [thread:$0]  %s268, 1024, %s270, %s258, 64, 64, 4
        $region32: #{tpu_custom_call.1} parent=27 // pred_fallthru
          _
        // Predicated region
        $region33: #{tpu_custom_call.1} parent=27 // pred_check
          %p276 = pneg %p128
        $region34: #{tpu_custom_call.1} parent=27 // pred_check_branch
          %278 = sbr.rel (%p276) target = $region36
        $region35: #{tpu_custom_call.1} parent=27 // pred_region
          %s279 = sand.u32 %s14, 1
          %s280 = scalar_lea.sflag [#allocation6], %s279
          %s281 = sand.u32 %s118, 1
          %s282 = scalar_lea.vmem [#allocation11], %s281
          %284 = vsyncadd %s280, 0
          %s285 = scalar_lea.hbm %s3, %s21
          %s287 = sshll.u32 %s285, 4
          %s288 = int_to_ptr.hbm [resolvable:$true] %s287
          %s289 = sshll.u32 %s282, 4
          %s290 = int_to_ptr.vmem [resolvable:$true] %s289
          %292 = dma.hbm_to_vmem [thread:$0]  %s288, 16, %s290, %s280
        $region36: #{tpu_custom_call.1} parent=27 // pred_fallthru
          _
      $region28: #{tpu_custom_call.1} parent=5 // pred_fallthru
        _
      %p293 = scmp.le.s32.totalorder 1, %s14
      %p294 = scmp.lt.s32.totalorder %s14, 4
      %p295 = pnand %p293, %p294
      %p296 = pneg %p295
      // Predicated region
      $region37: #{tpu_custom_call.1} parent=5 // pred_check
        _
      $region38: #{tpu_custom_call.1} parent=5 // pred_check_branch
        %298 = sbr.rel (%p295) target = $region40
      $region39: #{tpu_custom_call.1} parent=5 // pred_region
        %s299 = ssub.s32 %s14, 1
        // Predicated region
        $region41: #{tpu_custom_call.1} parent=39 // pred_check
          %p300 = pneg %p61
        $region42: #{tpu_custom_call.1} parent=39 // pred_check_branch
          %302 = sbr.rel (%p300) target = $region44
        $region43: #{tpu_custom_call.1} parent=39 // pred_region
          %304 = dma.done [#allocation6], 1024
        $region44: #{tpu_custom_call.1} parent=39 // pred_fallthru
          _
        // Predicated region
        $region45: #{tpu_custom_call.1} parent=39 // pred_check
          %p305 = pneg %p82
        $region46: #{tpu_custom_call.1} parent=39 // pred_check_branch
          %307 = sbr.rel (%p305) target = $region48
        $region47: #{tpu_custom_call.1} parent=39 // pred_region
          %309 = dma.done [#allocation9], 2048
        $region48: #{tpu_custom_call.1} parent=39 // pred_fallthru
          _
        %s310 = sand.u32 %s19, 1
        %s311 = scalar_lea.sflag [#allocation6], %s310
        %s312 = sand.u32 %s95, 1
        %s313 = smul.addr %s312, 64
        %s314 = scalar_lea.vmem [#allocation10], %s313
        // Predicated region
        $region49: #{tpu_custom_call.1} parent=39 // pred_check
          %p315 = pneg %p108
        $region50: #{tpu_custom_call.1} parent=39 // pred_check_branch
          %317 = sbr.rel (%p315) target = $region52
        $region51: #{tpu_custom_call.1} parent=39 // pred_region
          %319 = dma.done %s311, 1024
        $region52: #{tpu_custom_call.1} parent=39 // pred_fallthru
          _
        %s320 = sand.u32 %s19, 1
        %s321 = scalar_lea.sflag [#allocation6], %s320
        %s322 = sand.u32 %s121, 1
        %s323 = scalar_lea.vmem [#allocation11], %s322
        // Predicated region
        $region53: #{tpu_custom_call.1} parent=39 // pred_check
          %p324 = pneg %p134
        $region54: #{tpu_custom_call.1} parent=39 // pred_check_branch
          %326 = sbr.rel (%p324) target = $region56
        $region55: #{tpu_custom_call.1} parent=39 // pred_region
          %328 = dma.done %s321, 16
        $region56: #{tpu_custom_call.1} parent=39 // pred_fallthru
          _
        // Predicated region
        $region57: #{tpu_custom_call.1} parent=39 // pred_check
          %p329 = pneg %p160
        $region58: #{tpu_custom_call.1} parent=39 // pred_check_branch
          %331 = sbr.rel (%p329) target = $region60
        $region59: #{tpu_custom_call.1} parent=39 // pred_region
          %333 = dma.done [#allocation9], 2048
        $region60: #{tpu_custom_call.1} parent=39 // pred_fallthru
          _
        %p334 = pneg %p61
        %p335 = pneg %p58
        %p336 = pneg %p82
        %p337 = pneg %p79
        %s338 = sand.u32 %s19, 1
        %s339 = scalar_lea.sflag [#allocation6], %s338
        %s340 = sand.u32 %s95, 1
        %s341 = smul.addr %s340, 64
        %s342 = scalar_lea.vmem [#allocation10], %s341
        %p343 = pneg %p108
        %p344 = pneg %p105
        %s345 = sand.u32 %s19, 1
        %s346 = scalar_lea.sflag [#allocation6], %s345
        %s347 = sand.u32 %s121, 1
        %s348 = scalar_lea.vmem [#allocation11], %s347
        %p349 = pneg %p134
        %p350 = pneg %p131
        %p351 = pneg %p160
        %p352 = pneg %p157
        %p353 = pneg %p186
        %p354 = pneg %p183
        %s355 = smul.u32 16, %s25
        %s356 = smul.u32 16, %s25
        %s357 = smul.u32 16, %s25
        %p358 = scmp.eq.s32.totalorder %s24, 0
        %p359 = scmp.eq.s32.totalorder %s25, 0
        %p360 = pnand %p358, %p359
        %p361 = pneg %p360
        %p362 = scmp.eq.s32.totalorder %s26, 0
        %p363 = pnand %p361, %p362
        %p364 = pneg %p363
        // Predicated region
        $region61: #{tpu_custom_call.1} parent=39 // pred_check
          _
        $region62: #{tpu_custom_call.1} parent=39 // pred_check_branch
          %366 = sbr.rel (%p363) target = $region64
        $region63: #{tpu_custom_call.1} parent=39 // pred_region
          %v367 = vld [vmem:[#allocation8] sm:$0xff]
          %v368 = vld [vmem:[#allocation8 + $0x8] sm:$0xff]
          %v369 = vld [vmem:[#allocation8 + $0x10] sm:$0xff]
          %v370 = vld [vmem:[#allocation8 + $0x18] sm:$0xff]
          %v371 = vld [vmem:[#allocation8 + $0x20] sm:$0xff]
          %v372 = vld [vmem:[#allocation8 + $0x28] sm:$0xff]
          %v373 = vld [vmem:[#allocation8 + $0x30] sm:$0xff]
          %v374 = vld [vmem:[#allocation8 + $0x38] sm:$0xff]
          %v375 = vld [vmem:[#allocation8 + $0x40] sm:$0xff]
          %v376 = vld [vmem:[#allocation8 + $0x48] sm:$0xff]
          %v377 = vld [vmem:[#allocation8 + $0x50] sm:$0xff]
          %v378 = vld [vmem:[#allocation8 + $0x58] sm:$0xff]
          %v379 = vld [vmem:[#allocation8 + $0x60] sm:$0xff]
          %v380 = vld [vmem:[#allocation8 + $0x68] sm:$0xff]
          %v381 = vld [vmem:[#allocation8 + $0x70] sm:$0xff]
          %v382 = vld [vmem:[#allocation8 + $0x78] sm:$0xff]
          %383 = vst [vmem:[#allocation2] sm:$0xff] %v367
          %384 = vst [vmem:[#allocation2 + $0x8] sm:$0xff] %v368
          %385 = vst [vmem:[#allocation2 + $0x10] sm:$0xff] %v369
          %386 = vst [vmem:[#allocation2 + $0x18] sm:$0xff] %v370
          %387 = vst [vmem:[#allocation2 + $0x20] sm:$0xff] %v371
          %388 = vst [vmem:[#allocation2 + $0x28] sm:$0xff] %v372
          %389 = vst [vmem:[#allocation2 + $0x30] sm:$0xff] %v373
          %390 = vst [vmem:[#allocation2 + $0x38] sm:$0xff] %v374
          %391 = vst [vmem:[#allocation2 + $0x40] sm:$0xff] %v375
          %392 = vst [vmem:[#allocation2 + $0x48] sm:$0xff] %v376
          %393 = vst [vmem:[#allocation2 + $0x50] sm:$0xff] %v377
          %394 = vst [vmem:[#allocation2 + $0x58] sm:$0xff] %v378
          %395 = vst [vmem:[#allocation2 + $0x60] sm:$0xff] %v379
          %396 = vst [vmem:[#allocation2 + $0x68] sm:$0xff] %v380
          %397 = vst [vmem:[#allocation2 + $0x70] sm:$0xff] %v381
          %398 = vst [vmem:[#allocation2 + $0x78] sm:$0xff] %v382
        $region64: #{tpu_custom_call.1} parent=39 // pred_fallthru
          _
        %p399 = pnand %p359, %p362
        %p400 = pneg %p399
        // Predicated region
        $region65: #{tpu_custom_call.1} parent=39 // pred_check
          _
        $region66: #{tpu_custom_call.1} parent=39 // pred_check_branch
          %402 = sbr.rel (%p399) target = $region68
        $region67: #{tpu_custom_call.1} parent=39 // pred_region
          %v403 = vld [vmem:[#allocation2] sm:$0xff]
          %v404 = vld [vmem:[#allocation2 + $0x8] sm:$0xff]
          %v405 = vld [vmem:[#allocation2 + $0x10] sm:$0xff]
          %v406 = vld [vmem:[#allocation2 + $0x18] sm:$0xff]
          %v407 = vld [vmem:[#allocation2 + $0x20] sm:$0xff]
          %v408 = vld [vmem:[#allocation2 + $0x28] sm:$0xff]
          %v409 = vld [vmem:[#allocation2 + $0x30] sm:$0xff]
          %v410 = vld [vmem:[#allocation2 + $0x38] sm:$0xff]
          %v411 = vld [vmem:[#allocation2 + $0x40] sm:$0xff]
          %v412 = vld [vmem:[#allocation2 + $0x48] sm:$0xff]
          %v413 = vld [vmem:[#allocation2 + $0x50] sm:$0xff]
          %v414 = vld [vmem:[#allocation2 + $0x58] sm:$0xff]
          %v415 = vld [vmem:[#allocation2 + $0x60] sm:$0xff]
          %v416 = vld [vmem:[#allocation2 + $0x68] sm:$0xff]
          %v417 = vld [vmem:[#allocation2 + $0x70] sm:$0xff]
          %v418 = vld [vmem:[#allocation2 + $0x78] sm:$0xff]
          %v419 = vpack.c.bf16 %v404, %v403
          %v420 = vpack.c.bf16 %v406, %v405
          %v421 = vpack.c.bf16 %v408, %v407
          %v422 = vpack.c.bf16 %v410, %v409
          %v423 = vpack.c.bf16 %v412, %v411
          %v424 = vpack.c.bf16 %v414, %v413
          %v425 = vpack.c.bf16 %v416, %v415
          %v426 = vpack.c.bf16 %v418, %v417
          %v427 = vld [vmem:[%s314] sm:$0xf]
          %v428 = vld [vmem:[%s314 + $0x4] sm:$0xf]
          %v429 = vld [vmem:[%s314 + $0x8] sm:$0xf]
          %v430 = vld [vmem:[%s314 + $0xc] sm:$0xf]
          %v431 = vld [vmem:[%s314 + $0x10] sm:$0xf]
          %v432 = vld [vmem:[%s314 + $0x14] sm:$0xf]
          %v433 = vld [vmem:[%s314 + $0x18] sm:$0xf]
          %v434 = vld [vmem:[%s314 + $0x1c] sm:$0xf]
          %v435 = vld [vmem:[%s314 + $0x20] sm:$0xf]
          %v436 = vld [vmem:[%s314 + $0x24] sm:$0xf]
          %v437 = vld [vmem:[%s314 + $0x28] sm:$0xf]
          %v438 = vld [vmem:[%s314 + $0x2c] sm:$0xf]
          %v439 = vld [vmem:[%s314 + $0x30] sm:$0xf]
          %v440 = vld [vmem:[%s314 + $0x34] sm:$0xf]
          %v441 = vld [vmem:[%s314 + $0x38] sm:$0xf]
          %v442 = vld [vmem:[%s314 + $0x3c] sm:$0xf]
          %v459 = vunpack.c.l.b16 %v427
          %v460 = vunpack.c.l.b16 %v428
          %v461 = vunpack.c.l.b16 %v429
          %v462 = vunpack.c.l.b16 %v430
          %v463 = vunpack.c.l.b16 %v431
          %v464 = vunpack.c.l.b16 %v432
          %v465 = vunpack.c.l.b16 %v433
          %v466 = vunpack.c.l.b16 %v434
          %v467 = vunpack.c.l.b16 %v435
          %v468 = vunpack.c.l.b16 %v436
          %v469 = vunpack.c.l.b16 %v437
          %v470 = vunpack.c.l.b16 %v438
          %v471 = vunpack.c.l.b16 %v439
          %v472 = vunpack.c.l.b16 %v440
          %v473 = vunpack.c.l.b16 %v441
          %v474 = vunpack.c.l.b16 %v442
          %v475 = vpack.c.b16 %v460, %v459
          %v476 = vpack.c.b16 %v462, %v461
          %v477 = vpack.c.b16 %v464, %v463
          %v478 = vpack.c.b16 %v466, %v465
          %v479 = vpack.c.b16 %v468, %v467
          %v480 = vpack.c.b16 %v470, %v469
          %v481 = vpack.c.b16 %v472, %v471
          %v482 = vpack.c.b16 %v474, %v473
          %491 = vmatpush.bf16.msra.mxu0 %v482
          %492 = vmatpush.bf16.msra.mxu0 %v481
          %493 = vmatpush.bf16.msra.mxu0 %v480
          %494 = vmatpush.bf16.msra.mxu0 %v479
          %495 = vmatpush.bf16.msra.mxu0 %v478
          %496 = vmatpush.bf16.msra.mxu0 %v477
          %497 = vmatpush.bf16.msra.mxu0 %v476
          %498 = vmatpush.bf16.msra.mxu0 %v475
          %499 = vmatmul.bf16.gmra.mxu0 %v419
          %v500 = vpop.f32.mrf.mxu0
          %v501 = vadd.f32 0.0, %v500
          %v502 = vpop.f32.mrf.mxu0
          %v503 = vadd.f32 0.0, %v502
          %504 = vmatmul.bf16.gmra.mxu0 %v420
          %v505 = vpop.f32.mrf.mxu0
          %v506 = vadd.f32 0.0, %v505
          %v507 = vpop.f32.mrf.mxu0
          %v508 = vadd.f32 0.0, %v507
          %509 = vmatmul.bf16.gmra.mxu0 %v421
          %v510 = vpop.f32.mrf.mxu0
          %v511 = vadd.f32 0.0, %v510
          %v512 = vpop.f32.mrf.mxu0
          %v513 = vadd.f32 0.0, %v512
          %514 = vmatmul.bf16.gmra.mxu0 %v422
          %v515 = vpop.f32.mrf.mxu0
          %v516 = vadd.f32 0.0, %v515
          %v517 = vpop.f32.mrf.mxu0
          %v518 = vadd.f32 0.0, %v517
          %519 = vmatmul.bf16.gmra.mxu0 %v423
          %v520 = vpop.f32.mrf.mxu0
          %v521 = vadd.f32 0.0, %v520
          %v522 = vpop.f32.mrf.mxu0
          %v523 = vadd.f32 0.0, %v522
          %524 = vmatmul.bf16.gmra.mxu0 %v424
          %v525 = vpop.f32.mrf.mxu0
          %v526 = vadd.f32 0.0, %v525
          %v527 = vpop.f32.mrf.mxu0
          %v528 = vadd.f32 0.0, %v527
          %529 = vmatmul.bf16.gmra.mxu0 %v425
          %v530 = vpop.f32.mrf.mxu0
          %v531 = vadd.f32 0.0, %v530
          %v532 = vpop.f32.mrf.mxu0
          %v533 = vadd.f32 0.0, %v532
          %534 = vmatmul.bf16.gmra.mxu0 %v426
          %v535 = vpop.f32.mrf.mxu0
          %v536 = vadd.f32 0.0, %v535
          %v537 = vpop.f32.mrf.mxu0
          %v538 = vadd.f32 0.0, %v537
          %539 = vdwg.mxu0
          %v540 = vpack.c.bf16 %v501, %v501
          %v541 = vpack.c.bf16 %v503, %v503
          %v542 = vpack.c.bf16 %v506, %v506
          %v543 = vpack.c.bf16 %v508, %v508
          %v544 = vpack.c.bf16 %v511, %v511
          %v545 = vpack.c.bf16 %v513, %v513
          %v546 = vpack.c.bf16 %v516, %v516
          %v547 = vpack.c.bf16 %v518, %v518
          %v548 = vpack.c.bf16 %v521, %v521
          %v549 = vpack.c.bf16 %v523, %v523
          %v550 = vpack.c.bf16 %v526, %v526
          %v551 = vpack.c.bf16 %v528, %v528
          %v552 = vpack.c.bf16 %v531, %v531
          %v553 = vpack.c.bf16 %v533, %v533
          %v554 = vpack.c.bf16 %v536, %v536
          %v555 = vpack.c.bf16 %v538, %v538
          %556 = vst [vmem:[#allocation3] sm:$0xf] %v540
          %557 = vst [vmem:[#allocation3 + $0x4] sm:$0xf] %v541
          %558 = vst [vmem:[#allocation3 + $0x8] sm:$0xf] %v542
          %559 = vst [vmem:[#allocation3 + $0xc] sm:$0xf] %v543
          %560 = vst [vmem:[#allocation3 + $0x10] sm:$0xf] %v544
          %561 = vst [vmem:[#allocation3 + $0x14] sm:$0xf] %v545
          %562 = vst [vmem:[#allocation3 + $0x18] sm:$0xf] %v546
          %563 = vst [vmem:[#allocation3 + $0x1c] sm:$0xf] %v547
          %564 = vst [vmem:[#allocation3 + $0x20] sm:$0xf] %v548
          %565 = vst [vmem:[#allocation3 + $0x24] sm:$0xf] %v549
          %566 = vst [vmem:[#allocation3 + $0x28] sm:$0xf] %v550
          %567 = vst [vmem:[#allocation3 + $0x2c] sm:$0xf] %v551
          %568 = vst [vmem:[#allocation3 + $0x30] sm:$0xf] %v552
          %569 = vst [vmem:[#allocation3 + $0x34] sm:$0xf] %v553
          %570 = vst [vmem:[#allocation3 + $0x38] sm:$0xf] %v554
          %571 = vst [vmem:[#allocation3 + $0x3c] sm:$0xf] %v555
        $region68: #{tpu_custom_call.1} parent=39 // pred_fallthru
          _
        // Predicated region
        $region69: #{tpu_custom_call.1} parent=39 // pred_check
          %p572 = pneg %p362
        $region70: #{tpu_custom_call.1} parent=39 // pred_check_branch
          %574 = sbr.rel (%p572) target = $region72
        $region71: #{tpu_custom_call.1} parent=39 // pred_region
          %575 = vst [vmem:[#allocation4] sm:$0xff] 0.0
          %576 = vst [vmem:[#allocation4 + $0x8] sm:$0xff] 0.0
          %577 = vst [vmem:[#allocation4 + $0x10] sm:$0xff] 0.0
          %578 = vst [vmem:[#allocation4 + $0x18] sm:$0xff] 0.0
          %579 = vst [vmem:[#allocation4 + $0x20] sm:$0xff] 0.0
          %580 = vst [vmem:[#allocation4 + $0x28] sm:$0xff] 0.0
          %581 = vst [vmem:[#allocation4 + $0x30] sm:$0xff] 0.0
          %582 = vst [vmem:[#allocation4 + $0x38] sm:$0xff] 0.0
          %583 = vst [vmem:[#allocation4 + $0x40] sm:$0xff] 0.0
          %584 = vst [vmem:[#allocation4 + $0x48] sm:$0xff] 0.0
          %585 = vst [vmem:[#allocation4 + $0x50] sm:$0xff] 0.0
          %586 = vst [vmem:[#allocation4 + $0x58] sm:$0xff] 0.0
          %587 = vst [vmem:[#allocation4 + $0x60] sm:$0xff] 0.0
          %588 = vst [vmem:[#allocation4 + $0x68] sm:$0xff] 0.0
          %589 = vst [vmem:[#allocation4 + $0x70] sm:$0xff] 0.0
          %590 = vst [vmem:[#allocation4 + $0x78] sm:$0xff] 0.0
        $region72: #{tpu_custom_call.1} parent=39 // pred_fallthru
          _
        %s591 = smul.u32 %s26, 128
        %v592 = vld [vmem:[#allocation4] sm:$0xff]
        %v593 = vld [vmem:[#allocation4 + $0x8] sm:$0xff]
        %v594 = vld [vmem:[#allocation4 + $0x10] sm:$0xff]
        %v595 = vld [vmem:[#allocation4 + $0x18] sm:$0xff]
        %v596 = vld [vmem:[#allocation4 + $0x20] sm:$0xff]
        %v597 = vld [vmem:[#allocation4 + $0x28] sm:$0xff]
        %v598 = vld [vmem:[#allocation4 + $0x30] sm:$0xff]
        %v599 = vld [vmem:[#allocation4 + $0x38] sm:$0xff]
        %v600 = vld [vmem:[#allocation4 + $0x40] sm:$0xff]
        %v601 = vld [vmem:[#allocation4 + $0x48] sm:$0xff]
        %v602 = vld [vmem:[#allocation4 + $0x50] sm:$0xff]
        %v603 = vld [vmem:[#allocation4 + $0x58] sm:$0xff]
        %v604 = vld [vmem:[#allocation4 + $0x60] sm:$0xff]
        %v605 = vld [vmem:[#allocation4 + $0x68] sm:$0xff]
        %v606 = vld [vmem:[#allocation4 + $0x70] sm:$0xff]
        %v607 = vld [vmem:[#allocation4 + $0x78] sm:$0xff]
        %v608 = vld [vmem:[#allocation5] sm:$0xf]
        %v609 = vld [vmem:[#allocation5 + $0x4] sm:$0xf]
        %v610 = vld [vmem:[#allocation5 + $0x8] sm:$0xf]
        %v611 = vld [vmem:[#allocation5 + $0xc] sm:$0xf]
        %v612 = vld [vmem:[#allocation5 + $0x10] sm:$0xf]
        %v613 = vld [vmem:[#allocation5 + $0x14] sm:$0xf]
        %v614 = vld [vmem:[#allocation5 + $0x18] sm:$0xf]
        %v615 = vld [vmem:[#allocation5 + $0x1c] sm:$0xf]
        %v616 = vld [vmem:[#allocation5 + $0x20] sm:$0xf]
        %v617 = vld [vmem:[#allocation5 + $0x24] sm:$0xf]
        %v618 = vld [vmem:[#allocation5 + $0x28] sm:$0xf]
        %v619 = vld [vmem:[#allocation5 + $0x2c] sm:$0xf]
        %v620 = vld [vmem:[#allocation5 + $0x30] sm:$0xf]
        %v621 = vld [vmem:[#allocation5 + $0x34] sm:$0xf]
        %v622 = vld [vmem:[#allocation5 + $0x38] sm:$0xf]
        %v623 = vld [vmem:[#allocation5 + $0x3c] sm:$0xf]
        %s624 = sshra.s32 %s591, 3
        %s625 = sand.u32 %s591, 7
        %s626 = smul.addr %s624, 4
        %s627 = scalar_lea.vmem [#allocation3], %s626
        %v628 = vld [vmem:[%s627] sm:$0xf]
        %v629 = vld [vmem:[%s627 + $0x4] sm:$0xf]
        %v630 = vld [vmem:[%s627 + $0x8] sm:$0xf]
        %v631 = vld [vmem:[%s627 + $0xc] sm:$0xf]
        %v632 = vld [vmem:[%s627 + $0x10] sm:$0xf]
        %v633 = vld [vmem:[%s627 + $0x14] sm:$0xf]
        %v634 = vld [vmem:[%s627 + $0x18] sm:$0xf]
        %v635 = vld [vmem:[%s627 + $0x1c] sm:$0xf]
        %v636 = vld [vmem:[%s627 + $0x20] sm:$0xf]
        %v637 = vld [vmem:[%s627 + $0x24] sm:$0xf]
        %v638 = vld [vmem:[%s627 + $0x28] sm:$0xf]
        %v639 = vld [vmem:[%s627 + $0x2c] sm:$0xf]
        %v640 = vld [vmem:[%s627 + $0x30] sm:$0xf]
        %v641 = vld [vmem:[%s627 + $0x34] sm:$0xf]
        %v642 = vld [vmem:[%s627 + $0x38] sm:$0xf]
        %v643 = vld [vmem:[%s627 + $0x3c] sm:$0xf]
        %v660 = vunpack.c.l.b16 %v608
        %v661 = vunpack.c.l.b16 %v609
        %v662 = vunpack.c.l.b16 %v610
        %v663 = vunpack.c.l.b16 %v611
        %v664 = vunpack.c.l.b16 %v612
        %v665 = vunpack.c.l.b16 %v613
        %v666 = vunpack.c.l.b16 %v614
        %v667 = vunpack.c.l.b16 %v615
        %v668 = vunpack.c.l.b16 %v616
        %v669 = vunpack.c.l.b16 %v617
        %v670 = vunpack.c.l.b16 %v618
        %v671 = vunpack.c.l.b16 %v619
        %v672 = vunpack.c.l.b16 %v620
        %v673 = vunpack.c.l.b16 %v621
        %v674 = vunpack.c.l.b16 %v622
        %v675 = vunpack.c.l.b16 %v623
        %v676 = vpack.c.b16 %v661, %v660
        %v677 = vpack.c.b16 %v663, %v662
        %v678 = vpack.c.b16 %v665, %v664
        %v679 = vpack.c.b16 %v667, %v666
        %v680 = vpack.c.b16 %v669, %v668
        %v681 = vpack.c.b16 %v671, %v670
        %v682 = vpack.c.b16 %v673, %v672
        %v683 = vpack.c.b16 %v675, %v674
        %v708 = vunpack.c.l.b16 %v628
        %v709 = vunpack.c.l.b16 %v629
        %v710 = vunpack.c.l.b16 %v630
        %v711 = vunpack.c.l.b16 %v631
        %v712 = vunpack.c.l.b16 %v632
        %v713 = vunpack.c.l.b16 %v633
        %v714 = vunpack.c.l.b16 %v634
        %v715 = vunpack.c.l.b16 %v635
        %v716 = vunpack.c.l.b16 %v636
        %v717 = vunpack.c.l.b16 %v637
        %v718 = vunpack.c.l.b16 %v638
        %v719 = vunpack.c.l.b16 %v639
        %v720 = vunpack.c.l.b16 %v640
        %v721 = vunpack.c.l.b16 %v641
        %v722 = vunpack.c.l.b16 %v642
        %v723 = vunpack.c.l.b16 %v643
        %v724 = vpack.c.b16 %v709, %v708
        %v725 = vpack.c.b16 %v711, %v710
        %v726 = vpack.c.b16 %v713, %v712
        %v727 = vpack.c.b16 %v715, %v714
        %v728 = vpack.c.b16 %v717, %v716
        %v729 = vpack.c.b16 %v719, %v718
        %v730 = vpack.c.b16 %v721, %v720
        %v731 = vpack.c.b16 %v723, %v722
        %740 = vmatpush.bf16.msra.mxu0 %v731
        %741 = vmatpush.bf16.msra.mxu0 %v730
        %742 = vmatpush.bf16.msra.mxu0 %v729
        %743 = vmatpush.bf16.msra.mxu0 %v728
        %744 = vmatpush.bf16.msra.mxu0 %v727
        %745 = vmatpush.bf16.msra.mxu0 %v726
        %746 = vmatpush.bf16.msra.mxu0 %v725
        %747 = vmatpush.bf16.msra.mxu0 %v724
        %748 = vmatmul.bf16.gmra.mxu0 %v676
        %v749 = vpop.f32.mrf.mxu0
        %v750 = vadd.f32 0.0, %v749
        %v751 = vpop.f32.mrf.mxu0
        %v752 = vadd.f32 0.0, %v751
        %753 = vmatmul.bf16.gmra.mxu0 %v677
        %v754 = vpop.f32.mrf.mxu0
        %v755 = vadd.f32 0.0, %v754
        %v756 = vpop.f32.mrf.mxu0
        %v757 = vadd.f32 0.0, %v756
        %758 = vmatmul.bf16.gmra.mxu0 %v678
        %v759 = vpop.f32.mrf.mxu0
        %v760 = vadd.f32 0.0, %v759
        %v761 = vpop.f32.mrf.mxu0
        %v762 = vadd.f32 0.0, %v761
        %763 = vmatmul.bf16.gmra.mxu0 %v679
        %v764 = vpop.f32.mrf.mxu0
        %v765 = vadd.f32 0.0, %v764
        %v766 = vpop.f32.mrf.mxu0
        %v767 = vadd.f32 0.0, %v766
        %768 = vmatmul.bf16.gmra.mxu0 %v680
        %v769 = vpop.f32.mrf.mxu0
        %v770 = vadd.f32 0.0, %v769
        %v771 = vpop.f32.mrf.mxu0
        %v772 = vadd.f32 0.0, %v771
        %773 = vmatmul.bf16.gmra.mxu0 %v681
        %v774 = vpop.f32.mrf.mxu0
        %v775 = vadd.f32 0.0, %v774
        %v776 = vpop.f32.mrf.mxu0
        %v777 = vadd.f32 0.0, %v776
        %778 = vmatmul.bf16.gmra.mxu0 %v682
        %v779 = vpop.f32.mrf.mxu0
        %v780 = vadd.f32 0.0, %v779
        %v781 = vpop.f32.mrf.mxu0
        %v782 = vadd.f32 0.0, %v781
        %783 = vmatmul.bf16.gmra.mxu0 %v683
        %v784 = vpop.f32.mrf.mxu0
        %v785 = vadd.f32 0.0, %v784
        %v786 = vpop.f32.mrf.mxu0
        %v787 = vadd.f32 0.0, %v786
        %788 = vdwg.mxu0
        %v789 = vadd.f32 %v592, %v750
        %v790 = vadd.f32 %v593, %v752
        %v791 = vadd.f32 %v594, %v755
        %v792 = vadd.f32 %v595, %v757
        %v793 = vadd.f32 %v596, %v760
        %v794 = vadd.f32 %v597, %v762
        %v795 = vadd.f32 %v598, %v765
        %v796 = vadd.f32 %v599, %v767
        %v797 = vadd.f32 %v600, %v770
        %v798 = vadd.f32 %v601, %v772
        %v799 = vadd.f32 %v602, %v775
        %v800 = vadd.f32 %v603, %v777
        %v801 = vadd.f32 %v604, %v780
        %v802 = vadd.f32 %v605, %v782
        %v803 = vadd.f32 %v606, %v785
        %v804 = vadd.f32 %v607, %v787
        %805 = vst [vmem:[#allocation4] sm:$0xff] %v789
        %806 = vst [vmem:[#allocation4 + $0x8] sm:$0xff] %v790
        %807 = vst [vmem:[#allocation4 + $0x10] sm:$0xff] %v791
        %808 = vst [vmem:[#allocation4 + $0x18] sm:$0xff] %v792
        %809 = vst [vmem:[#allocation4 + $0x20] sm:$0xff] %v793
        %810 = vst [vmem:[#allocation4 + $0x28] sm:$0xff] %v794
        %811 = vst [vmem:[#allocation4 + $0x30] sm:$0xff] %v795
        %812 = vst [vmem:[#allocation4 + $0x38] sm:$0xff] %v796
        %813 = vst [vmem:[#allocation4 + $0x40] sm:$0xff] %v797
        %814 = vst [vmem:[#allocation4 + $0x48] sm:$0xff] %v798
        %815 = vst [vmem:[#allocation4 + $0x50] sm:$0xff] %v799
        %816 = vst [vmem:[#allocation4 + $0x58] sm:$0xff] %v800
        %817 = vst [vmem:[#allocation4 + $0x60] sm:$0xff] %v801
        %818 = vst [vmem:[#allocation4 + $0x68] sm:$0xff] %v802
        %819 = vst [vmem:[#allocation4 + $0x70] sm:$0xff] %v803
        %820 = vst [vmem:[#allocation4 + $0x78] sm:$0xff] %v804
        // Predicated region
        $region73: #{tpu_custom_call.1} parent=39 // pred_check
          %p821 = pneg %p362
        $region74: #{tpu_custom_call.1} parent=39 // pred_check_branch
          %823 = sbr.rel (%p821) target = $region76
        $region75: #{tpu_custom_call.1} parent=39 // pred_region
          %v824 = vld [vmem:[#allocation4] sm:$0xff]
          %v825 = vld [vmem:[#allocation4 + $0x8] sm:$0xff]
          %v826 = vld [vmem:[#allocation4 + $0x10] sm:$0xff]
          %v827 = vld [vmem:[#allocation4 + $0x18] sm:$0xff]
          %v828 = vld [vmem:[#allocation4 + $0x20] sm:$0xff]
          %v829 = vld [vmem:[#allocation4 + $0x28] sm:$0xff]
          %v830 = vld [vmem:[#allocation4 + $0x30] sm:$0xff]
          %v831 = vld [vmem:[#allocation4 + $0x38] sm:$0xff]
          %v832 = vld [vmem:[#allocation4 + $0x40] sm:$0xff]
          %v833 = vld [vmem:[#allocation4 + $0x48] sm:$0xff]
          %v834 = vld [vmem:[#allocation4 + $0x50] sm:$0xff]
          %v835 = vld [vmem:[#allocation4 + $0x58] sm:$0xff]
          %v836 = vld [vmem:[#allocation4 + $0x60] sm:$0xff]
          %v837 = vld [vmem:[#allocation4 + $0x68] sm:$0xff]
          %v838 = vld [vmem:[#allocation4 + $0x70] sm:$0xff]
          %v839 = vld [vmem:[#allocation4 + $0x78] sm:$0xff]
          %v840 = vld [vmem:[%s323] sm:$0x1]
          %v842 = vperm.slane %v840, 0
          %v844 = vadd.f32 %v824, %v842
          %v845 = vadd.f32 %v825, %v842
          %v846 = vadd.f32 %v826, %v842
          %v847 = vadd.f32 %v827, %v842
          %v848 = vadd.f32 %v828, %v842
          %v849 = vadd.f32 %v829, %v842
          %v850 = vadd.f32 %v830, %v842
          %v851 = vadd.f32 %v831, %v842
          %v852 = vadd.f32 %v832, %v842
          %v853 = vadd.f32 %v833, %v842
          %v854 = vadd.f32 %v834, %v842
          %v855 = vadd.f32 %v835, %v842
          %v856 = vadd.f32 %v836, %v842
          %v857 = vadd.f32 %v837, %v842
          %v858 = vadd.f32 %v838, %v842
          %v859 = vadd.f32 %v839, %v842
          %v860 = vmax.f32 %v844, 0.0
          %v861 = vmax.f32 %v845, 0.0
          %v862 = vmax.f32 %v846, 0.0
          %v863 = vmax.f32 %v847, 0.0
          %v864 = vmax.f32 %v848, 0.0
          %v865 = vmax.f32 %v849, 0.0
          %v866 = vmax.f32 %v850, 0.0
          %v867 = vmax.f32 %v851, 0.0
          %v868 = vmax.f32 %v852, 0.0
          %v869 = vmax.f32 %v853, 0.0
          %v870 = vmax.f32 %v854, 0.0
          %v871 = vmax.f32 %v855, 0.0
          %v872 = vmax.f32 %v856, 0.0
          %v873 = vmax.f32 %v857, 0.0
          %v874 = vmax.f32 %v858, 0.0
          %v875 = vmax.f32 %v859, 0.0
          %p876 = scmp.eq.s32.totalorder %s24, 1
          %v877 = vld [vmem:[#allocation12] sm:$0xff]
          %v878 = vld [vmem:[#allocation12 + $0x8] sm:$0xff]
          %v879 = vld [vmem:[#allocation12 + $0x10] sm:$0xff]
          %v880 = vld [vmem:[#allocation12 + $0x18] sm:$0xff]
          %v881 = vld [vmem:[#allocation12 + $0x20] sm:$0xff]
          %v882 = vld [vmem:[#allocation12 + $0x28] sm:$0xff]
          %v883 = vld [vmem:[#allocation12 + $0x30] sm:$0xff]
          %v884 = vld [vmem:[#allocation12 + $0x38] sm:$0xff]
          %v885 = vld [vmem:[#allocation12 + $0x40] sm:$0xff]
          %v886 = vld [vmem:[#allocation12 + $0x48] sm:$0xff]
          %v887 = vld [vmem:[#allocation12 + $0x50] sm:$0xff]
          %v888 = vld [vmem:[#allocation12 + $0x58] sm:$0xff]
          %v889 = vld [vmem:[#allocation12 + $0x60] sm:$0xff]
          %v890 = vld [vmem:[#allocation12 + $0x68] sm:$0xff]
          %v891 = vld [vmem:[#allocation12 + $0x70] sm:$0xff]
          %v892 = vld [vmem:[#allocation12 + $0x78] sm:$0xff]
          %v893 = vadd.s32 %v877, 2147483648
          %vm895 = vcmp.ge.s32.totalorder %v893, 3865470566
          %v896 = vadd.s32 %v878, 2147483648
          %vm898 = vcmp.ge.s32.totalorder %v896, 3865470566
          %v899 = vadd.s32 %v879, 2147483648
          %vm901 = vcmp.ge.s32.totalorder %v899, 3865470566
          %v902 = vadd.s32 %v880, 2147483648
          %vm904 = vcmp.ge.s32.totalorder %v902, 3865470566
          %v905 = vadd.s32 %v881, 2147483648
          %vm907 = vcmp.ge.s32.totalorder %v905, 3865470566
          %v908 = vadd.s32 %v882, 2147483648
          %vm910 = vcmp.ge.s32.totalorder %v908, 3865470566
          %v911 = vadd.s32 %v883, 2147483648
          %vm913 = vcmp.ge.s32.totalorder %v911, 3865470566
          %v914 = vadd.s32 %v884, 2147483648
          %vm916 = vcmp.ge.s32.totalorder %v914, 3865470566
          %v917 = vadd.s32 %v885, 2147483648
          %vm919 = vcmp.ge.s32.totalorder %v917, 3865470566
          %v920 = vadd.s32 %v886, 2147483648
          %vm922 = vcmp.ge.s32.totalorder %v920, 3865470566
          %v923 = vadd.s32 %v887, 2147483648
          %vm925 = vcmp.ge.s32.totalorder %v923, 3865470566
          %v926 = vadd.s32 %v888, 2147483648
          %vm928 = vcmp.ge.s32.totalorder %v926, 3865470566
          %v929 = vadd.s32 %v889, 2147483648
          %vm931 = vcmp.ge.s32.totalorder %v929, 3865470566
          %v932 = vadd.s32 %v890, 2147483648
          %vm934 = vcmp.ge.s32.totalorder %v932, 3865470566
          %v935 = vadd.s32 %v891, 2147483648
          %vm937 = vcmp.ge.s32.totalorder %v935, 3865470566
          %v938 = vadd.s32 %v892, 2147483648
          %vm940 = vcmp.ge.s32.totalorder %v938, 3865470566
          %s941 = scalar_select %p876, 1.6666666, 1.0
          %v942 = vstv %s941
          %v943 = vmul.f32 %v860, %v942
          %v944 = vmul.f32 %v861, %v942
          %v945 = vmul.f32 %v862, %v942
          %v946 = vmul.f32 %v863, %v942
          %v947 = vmul.f32 %v864, %v942
          %v948 = vmul.f32 %v865, %v942
          %v949 = vmul.f32 %v866, %v942
          %v950 = vmul.f32 %v867, %v942
          %v951 = vmul.f32 %v868, %v942
          %v952 = vmul.f32 %v869, %v942
          %v953 = vmul.f32 %v870, %v942
          %v954 = vmul.f32 %v871, %v942
          %v955 = vmul.f32 %v872, %v942
          %v956 = vmul.f32 %v873, %v942
          %v957 = vmul.f32 %v874, %v942
          %v958 = vmul.f32 %v875, %v942
          %vm959 = vmxor %vm895, 1
          %vm960 = vmxor %vm898, 1
          %vm961 = vmxor %vm901, 1
          %vm962 = vmxor %vm904, 1
          %vm963 = vmxor %vm907, 1
          %vm964 = vmxor %vm910, 1
          %vm965 = vmxor %vm913, 1
          %vm966 = vmxor %vm916, 1
          %vm967 = vmxor %vm919, 1
          %vm968 = vmxor %vm922, 1
          %vm969 = vmxor %vm925, 1
          %vm970 = vmxor %vm928, 1
          %vm971 = vmxor %vm931, 1
          %vm972 = vmxor %vm934, 1
          %vm973 = vmxor %vm937, 1
          %vm974 = vmxor %vm940, 1
          %s975 = scalar_select %p876, 1, 0
          %v976 = vstv %s975
          %vm977 = vcmp.eq.s32.totalorder %v976, 1
          %vm978 = vmand %vm977, %vm959
          %vm979 = vmand %vm977, %vm960
          %vm980 = vmand %vm977, %vm961
          %vm981 = vmand %vm977, %vm962
          %vm982 = vmand %vm977, %vm963
          %vm983 = vmand %vm977, %vm964
          %vm984 = vmand %vm977, %vm965
          %vm985 = vmand %vm977, %vm966
          %vm986 = vmand %vm977, %vm967
          %vm987 = vmand %vm977, %vm968
          %vm988 = vmand %vm977, %vm969
          %vm989 = vmand %vm977, %vm970
          %vm990 = vmand %vm977, %vm971
          %vm991 = vmand %vm977, %vm972
          %vm992 = vmand %vm977, %vm973
          %vm993 = vmand %vm977, %vm974
          %v994 = vsel %vm978, 0.0, %v943
          %v995 = vsel %vm979, 0.0, %v944
          %v996 = vsel %vm980, 0.0, %v945
          %v997 = vsel %vm981, 0.0, %v946
          %v998 = vsel %vm982, 0.0, %v947
          %v999 = vsel %vm983, 0.0, %v948
          %v1000 = vsel %vm984, 0.0, %v949
          %v1001 = vsel %vm985, 0.0, %v950
          %v1002 = vsel %vm986, 0.0, %v951
          %v1003 = vsel %vm987, 0.0, %v952
          %v1004 = vsel %vm988, 0.0, %v953
          %v1005 = vsel %vm989, 0.0, %v954
          %v1006 = vsel %vm990, 0.0, %v955
          %v1007 = vsel %vm991, 0.0, %v956
          %v1008 = vsel %vm992, 0.0, %v957
          %v1009 = vsel %vm993, 0.0, %v958
          %s1010 = smul.u32 %s25, 128
          %s1011 = scalar_lea.vmem [#allocation2], %s1010
          %1012 = vst [vmem:[%s1011] sm:$0xff] %v994
          %1013 = vst [vmem:[%s1011 + $0x8] sm:$0xff] %v995
          %1014 = vst [vmem:[%s1011 + $0x10] sm:$0xff] %v996
          %1015 = vst [vmem:[%s1011 + $0x18] sm:$0xff] %v997
          %1016 = vst [vmem:[%s1011 + $0x20] sm:$0xff] %v998
          %1017 = vst [vmem:[%s1011 + $0x28] sm:$0xff] %v999
          %1018 = vst [vmem:[%s1011 + $0x30] sm:$0xff] %v1000
          %1019 = vst [vmem:[%s1011 + $0x38] sm:$0xff] %v1001
          %1020 = vst [vmem:[%s1011 + $0x40] sm:$0xff] %v1002
          %1021 = vst [vmem:[%s1011 + $0x48] sm:$0xff] %v1003
          %1022 = vst [vmem:[%s1011 + $0x50] sm:$0xff] %v1004
          %1023 = vst [vmem:[%s1011 + $0x58] sm:$0xff] %v1005
          %1024 = vst [vmem:[%s1011 + $0x60] sm:$0xff] %v1006
          %1025 = vst [vmem:[%s1011 + $0x68] sm:$0xff] %v1007
          %1026 = vst [vmem:[%s1011 + $0x70] sm:$0xff] %v1008
          %1027 = vst [vmem:[%s1011 + $0x78] sm:$0xff] %v1009
          %1028 = vst [vmem:[#allocation13] sm:$0xff] %v994
          %1029 = vst [vmem:[#allocation13 + $0x8] sm:$0xff] %v995
          %1030 = vst [vmem:[#allocation13 + $0x10] sm:$0xff] %v996
          %1031 = vst [vmem:[#allocation13 + $0x18] sm:$0xff] %v997
          %1032 = vst [vmem:[#allocation13 + $0x20] sm:$0xff] %v998
          %1033 = vst [vmem:[#allocation13 + $0x28] sm:$0xff] %v999
          %1034 = vst [vmem:[#allocation13 + $0x30] sm:$0xff] %v1000
          %1035 = vst [vmem:[#allocation13 + $0x38] sm:$0xff] %v1001
          %1036 = vst [vmem:[#allocation13 + $0x40] sm:$0xff] %v1002
          %1037 = vst [vmem:[#allocation13 + $0x48] sm:$0xff] %v1003
          %1038 = vst [vmem:[#allocation13 + $0x50] sm:$0xff] %v1004
          %1039 = vst [vmem:[#allocation13 + $0x58] sm:$0xff] %v1005
          %1040 = vst [vmem:[#allocation13 + $0x60] sm:$0xff] %v1006
          %1041 = vst [vmem:[#allocation13 + $0x68] sm:$0xff] %v1007
          %1042 = vst [vmem:[#allocation13 + $0x70] sm:$0xff] %v1008
          %1043 = vst [vmem:[#allocation13 + $0x78] sm:$0xff] %v1009
        $region76: #{tpu_custom_call.1} parent=39 // pred_fallthru
          _
        // Predicated region
        $region77: #{tpu_custom_call.1} parent=39 // pred_check
          %p1044 = pneg %p183
        $region78: #{tpu_custom_call.1} parent=39 // pred_check_branch
          %1046 = sbr.rel (%p1044) target = $region80
        $region79: #{tpu_custom_call.1} parent=39 // pred_region
          %s1047 = smul.u32 16, %s25
          %1049 = vsyncadd [#allocation7], 0
          %s1050 = smul.addr %s1047, 8
          %s1051 = scalar_lea.hbm %s5, %s1050
          %s1052 = sshll.u32 [#allocation13], 4
          %s1053 = int_to_ptr.vmem [resolvable:$true] %s1052
          %s1054 = sshll.u32 %s1051, 4
          %s1055 = int_to_ptr.hbm [resolvable:$true] %s1054
          %1060 = dma.vmem_to_hbm [thread:$0]  %s1053, 2048, %s1055, [#allocation7], 128, 128, 8
        $region80: #{tpu_custom_call.1} parent=39 // pred_fallthru
          _
        // Predicated region
        $region81: #{tpu_custom_call.1} parent=39 // pred_check
          %p1061 = pneg %p183
        $region82: #{tpu_custom_call.1} parent=39 // pred_check_branch
          %1063 = sbr.rel (%p1061) target = $region84
        $region83: #{tpu_custom_call.1} parent=39 // pred_region
          %1065 = dma.done [#allocation7], 2048
        $region84: #{tpu_custom_call.1} parent=39 // pred_fallthru
          _
      $region40: #{tpu_custom_call.1} parent=5 // pred_fallthru
        _
      %p1066 = scmp.le.s32.totalorder 2, %s14
      // Predicated region
      $region85: #{tpu_custom_call.1} parent=5 // pred_check
        %p1067 = pneg %p1066
      $region86: #{tpu_custom_call.1} parent=5 // pred_check_branch
        %1069 = sbr.rel (%p1067) target = $region88
      $region87: #{tpu_custom_call.1} parent=5 // pred_region
        %s1070 = ssub.s32 %s14, 2
      $region88: #{tpu_custom_call.1} parent=5 // pred_fallthru
        _
    $region6: #{tpu_custom_call.1} parent=1 // loop_footer
      %s18 = sadd.s32 1, %s14
    $region7: #{tpu_custom_call.1} parent=1 // loop_footer_branch
      %13 = sbr.rel target = $region3
    $region8: #{tpu_custom_call.1} parent=1 // loop_exit
      _
    %1071 = vsyncpa [#allocation6], 1
    %s1072 = scalar_lea.sflag [#allocation6], 1
    %1073 = vsyncpa %s1072, 1
    %1074 = vsyncpa [#allocation9], 1
    %1075 = vsyncpa [#allocation7], 1
    %s1076 = scalar_lea.sflag [#allocation7], 1
    %1077 = vsyncpa %s1076, 1

</llo_original>
